<compile_context>
chip_gen: v7x
topology: tpu7x:2x2x1
jax: 0.10.0
libtpu: 0.0.40
codegen_flags: <defaults>
</compile_context>

<pallas_src>
import functools

import jax
import jax.numpy as jnp
from jax.experimental import pallas as pl
from jax.experimental.pallas import tpu as pltpu

_LANE = 128
_SUBLANE = 8       # f32 sublane tile for the (8, 128) partial-sum output
_ROW_ALIGN = 32    # block-row alignment covering f32/bf16/int8 packed sublanes


def _l1_partial_kernel(x_ref, y_ref, o_ref, *, block_rows, valid_rows, need_mask):
    """Per-grid-step partial sum of |x - y|, folded into one (8, 128) f32 tile."""
    x = x_ref[...].astype(jnp.float32)
    y = y_ref[...].astype(jnp.float32)
    d = jnp.abs(x - y)                                              # (block_rows, 128)

    if need_mask:
        # Ragged last block: rows past the true end of the data hold undefined
        # (out-of-bounds) values -> zero them before accumulating.
        row = jax.lax.broadcasted_iota(jnp.int32, d.shape, 0)
        global_row = pl.program_id(0) * block_rows + row
        d = jnp.where(global_row < valid_rows, d, 0.0)

    if block_rows % _SUBLANE == 0:
        # Fold sublane groups elementwise: pure VPU adds, no cross-lane XLU work.
        partial = jnp.sum(d.reshape(-1, _SUBLANE, _LANE), axis=0)   # (8, 128)
    else:
        # Degenerate tiny-input path (single full-extent block with < 8k rows).
        colsum = jnp.sum(d, axis=0, keepdims=True)                  # (1, 128)
        row = jax.lax.broadcasted_iota(jnp.int32, (_SUBLANE, _LANE), 0)
        partial = jnp.where(row == 0,
                            jnp.broadcast_to(colsum, (_SUBLANE, _LANE)),
                            0.0)

    o_ref[...] = partial                                            # unmasked (8,128) store


def _device_tuning():
    """Return (per-input target bytes per grid step, TensorCores per chip)."""
    kind = ""
    try:
        kind = jax.devices()[0].device_kind.lower()
    except Exception:
        pass
    if "v7" in kind:
        return 4 << 20, 2   # ~3.2 TB/s per TC; 64 MiB VMEM -> budget explicitly
    if "v6" in kind:
        return 4 << 20, 1   # ~1.4 TB/s; plenty of VMEM headroom
    return 2 << 20, 1       # v5e / unknown: smaller blocks already near roofline


def _choose_block_rows(total_rows, bytes_per_row, target_bytes, num_cores):
    if total_rows <= 4 * _ROW_ALIGN:
        # Single full-extent block; always a legal (full-dim) BlockSpec.
        return total_rows
    br = max(_ROW_ALIGN, min(total_rows, target_bytes // max(bytes_per_row, 1)))
    # Keep >= 2 grid steps per TensorCore so the DMA pipeline overlaps compute
    # and the prologue/epilogue DMAs are hidden.
    min_steps = 2 * num_cores
    if total_rows >= min_steps * _ROW_ALIGN:
        br = min(br, total_rows // min_steps)
    br = max(_ROW_ALIGN, (br // _ROW_ALIGN) * _ROW_ALIGN)
    return min(br, total_rows)


def l1_loss(x, y):
    """Mean absolute error between two same-shaped arrays, via Pallas."""
    assert x.shape == y.shape, (x.shape, y.shape)
    n_elem = x.size

    xf = x.reshape(-1)
    yf = y.reshape(-1)

    rows = n_elem // _LANE
    main = rows * _LANE
    tail = n_elem - main

    # < 128-element lane tail (rare for conv feature maps): tiny XLA epilogue,
    # no wrapper-side padding copies of the bulk data in the common case.
    tail_sum = jnp.float32(0.0)
    if tail:
        tail_sum = jnp.sum(
            jnp.abs(xf[main:].astype(jnp.float32) - yf[main:].astype(jnp.float32)))

    if rows == 0:
        return tail_sum / jnp.float32(n_elem)

    # When n_elem % 128 == 0 this reshape is free (no data movement).
    x2d = (xf if tail == 0 else xf[:main]).reshape(rows, _LANE)
    y2d = (yf if tail == 0 else yf[:main]).reshape(rows, _LANE)

    itemsize = jnp.dtype(x.dtype).itemsize
    target_bytes, num_cores = _device_tuning()
    block_rows = _choose_block_rows(rows, _LANE * itemsize, target_bytes, num_cores)
    grid_steps = pl.cdiv(rows, block_rows)
    need_mask = (rows % block_rows) != 0

    block_bytes = block_rows * _LANE * itemsize
    # 2 inputs x 2 pipeline buffers x block + headroom (outputs/scratch are tiny).
    vmem_limit = int(4 * block_bytes + (8 << 20))

    kernel = functools.partial(
        _l1_partial_kernel,
        block_rows=block_rows, valid_rows=rows, need_mask=need_mask)

    partials = pl.pallas_call(
        kernel,
        out_shape=jax.ShapeDtypeStruct((grid_steps * _SUBLANE, _LANE), jnp.float32),
        grid_spec=pltpu.PrefetchScalarGridSpec(
            num_scalar_prefetch=0,
            grid=(grid_steps,),
            in_specs=[
                pl.BlockSpec((block_rows, _LANE), lambda i: (i, 0)),
                pl.BlockSpec((block_rows, _LANE), lambda i: (i, 0)),
            ],
            out_specs=pl.BlockSpec((_SUBLANE, _LANE), lambda i: (i, 0)),
        ),
        compiler_params=pltpu.CompilerParams(
            dimension_semantics=("parallel",),
            vmem_limit_bytes=vmem_limit,
        ),
        cost_estimate=pl.CostEstimate(
            flops=3 * main,
            transcendentals=0,
            bytes_accessed=2 * main * itemsize + grid_steps * _SUBLANE * _LANE * 4,
        ),
    )(x2d, y2d)

    # Tiny final reduction (grid_steps * 1024 floats) is left to XLA.
    return (jnp.sum(partials) + tail_sum) / jnp.float32(n_elem)


_DIVERSITY_WEIGHT = 1.0  # self.weights[4] in the PyTorch module


def diversity_loss(x_relu4_1, y_relu4_1):
    """weights[4] * L1Loss(x_vgg['relu4_1'], y_vgg['relu4_1'])."""
    return _DIVERSITY_WEIGHT * l1_loss(x_relu4_1, y_relu4_1)


def diversity_loss_ref(x_relu4_1, y_relu4_1):
    """Pure-JAX reference mirroring the PyTorch forward (L1Loss, mean reduction)."""
    return _DIVERSITY_WEIGHT * jnp.mean(
        jnp.abs(x_relu4_1.astype(jnp.float32) - y_relu4_1.astype(jnp.float32))
    )


if __name__ == "__main__":
    key = jax.random.PRNGKey(0)
    kx, ky, kx2, ky2, kx3, ky3 = jax.random.split(key, 6)

    # relu4_1 features of VGG16 for a small 64x64 input: (batch, 512, 8, 8).
    N, C, H, W = 2, 512, 8, 8
    x_feat = jax.random.normal(kx, (N, C, H, W), dtype=jnp.float32)
    y_feat = jax.random.normal(ky, (N, C, H, W), dtype=jnp.float32)
    out = jax.block_until_ready(diversity_loss(x_feat, y_feat))
    ref = diversity_loss_ref(x_feat, y_feat)
    assert out.shape == ()
    assert jnp.allclose(out, ref, atol=1e-5, rtol=1e-5), (out, ref)

    # Ragged shape: exercises the in-kernel row mask + lane-tail epilogue.
    xr = jax.random.normal(kx2, (1, 300, 9, 9), dtype=jnp.float32)
    yr = jax.random.normal(ky2, (1, 300, 9, 9), dtype=jnp.float32)
    out_r = jax.block_until_ready(diversity_loss(xr, yr))
    ref_r = diversity_loss_ref(xr, yr)
    assert jnp.allclose(out_r, ref_r, atol=1e-5, rtol=1e-5), (out_r, ref_r)

    # Tiny shape: exercises the single-full-block degenerate path.
    xt = jax.random.normal(kx3, (3, 7, 11), dtype=jnp.float32)
    yt = jax.random.normal(ky3, (3, 7, 11), dtype=jnp.float32)
    out_t = jax.block_until_ready(diversity_loss(xt, yt))
    ref_t = diversity_loss_ref(xt, yt)
    assert jnp.allclose(out_t, ref_t, atol=1e-5, rtol=1e-5), (out_t, ref_t)

    print("KERNEL_OK")
</pallas_src>

<mosaic_0001>
module attributes {stable_mosaic.version = 11 : i64} {
  func.func @_l1_partial_kernel(%arg0: i32, %arg1: memref<256x128xf32, #tpu.memory_space<vmem>>, %arg2: memref<256x128xf32, #tpu.memory_space<vmem>>, %arg3: memref<8x128xf32, #tpu.memory_space<vmem>>) attributes {dimension_semantics = [#tpu.dimension_semantics<parallel>], iteration_bounds = array<i64: 2>, scalar_prefetch = 0 : i64, scratch_operands = 0 : i64, tpu.core_type = #tpu.core_type<tc>, window_params = [{transform_indices = @transform_0, window_bounds = array<i64: 256, 128>}, {transform_indices = @transform_1, window_bounds = array<i64: 256, 128>}, {transform_indices = @transform_2, window_bounds = array<i64: 8, 128>}]} {
    %c0 = arith.constant 0 : index
    %c0_0 = arith.constant 0 : index
    %0 = vector.load %arg1[%c0, %c0_0] : memref<256x128xf32, #tpu.memory_space<vmem>>, vector<256x128xf32>
    %c0_1 = arith.constant 0 : index
    %c0_2 = arith.constant 0 : index
    %1 = vector.load %arg2[%c0_1, %c0_2] : memref<256x128xf32, #tpu.memory_space<vmem>>, vector<256x128xf32>
    %2 = arith.subf %0, %1 : vector<256x128xf32>
    %3 = math.absf %2 : vector<256x128xf32>
    %4 = vector.shape_cast %3 : vector<256x128xf32> to vector<32x8x128xf32>
    %cst = arith.constant dense<0.000000e+00> : vector<8x128xf32>
    %5 = vector.multi_reduction <add>, %4, %cst [0] : vector<32x8x128xf32> to vector<8x128xf32>
    %c0_3 = arith.constant 0 : index
    %c0_4 = arith.constant 0 : index
    %6 = vector.load %arg3[%c0_3, %c0_4] : memref<8x128xf32, #tpu.memory_space<vmem>>, vector<8x128xf32>
    tpu.vector_store %arg3[%c0_3, %c0_4], %5 {strides = array<i32>} : memref<8x128xf32, #tpu.memory_space<vmem>>, vector<8x128xf32>,
    return
  }
  func.func @transform_0(%arg0: i32) -> (i32, i32) {
    %c0_i32 = arith.constant 0 : i32
    %c0_i32_0 = arith.constant 0 : i32
    return %arg0, %c0_i32 : i32, i32
  }
  func.func @transform_1(%arg0: i32) -> (i32, i32) {
    %c0_i32 = arith.constant 0 : i32
    %c0_i32_0 = arith.constant 0 : i32
    return %arg0, %c0_i32 : i32, i32
  }
  func.func @transform_2(%arg0: i32) -> (i32, i32) {
    %c0_i32 = arith.constant 0 : i32
    %c0_i32_0 = arith.constant 0 : i32
    return %arg0, %c0_i32 : i32, i32
  }
}

</mosaic_0001>

<llo_original>
// kernel: tpu_custom_call.1
$region0: #{tpu_custom_call.1}
  #allocation0 [shape = 'u32[]', space=smem, size = 0x4, offset = 0x4, fixed_abs, tag = 'smem constant byte address 0x4 - core index']
  #allocation1 [shape = 'u32[144,128]{1,0:T(1,128)}', space=vmem, size = 0x12000, scoped, tag = 'internal scratch']
  %s0 = inlined_call_operand.hbm [shape: f32[512,128], index: 0, kind: input, shape index: {}]
  %s1 = inlined_call_operand.hbm [shape: f32[512,128], index: 1, kind: input, shape index: {}]
  %s2 = inlined_call_operand.hbm [shape: f32[16,128], index: 2, kind: output, shape index: {}]
  %s3 = sld [smem:[#allocation0]]
  $region49: #{tpu_custom_call.1} parent=0
    _
  %s5 = ssub.s32 1, %s3
  %s6 = scalar_select 0, %s5, %s3
  $region1: #{tpu_custom_call.1} parent=0
    #allocation2 [shape = 'u8[262144]{0}', space=vmem, size = 0x40000, scoped, tag = 'input window, operand 0']
    #allocation3 [shape = 's32[2]{0}', space=sflag, size = 0x8, scoped, tag = 'scoped memory for tpu_custom_call.1']
    #allocation4 [shape = 's32[2]{0}', space=sflag, size = 0x8, scoped, tag = 'scoped memory for tpu_custom_call.1']
    #allocation5 [shape = 'u8[262144]{0}', space=vmem, size = 0x40000, scoped, tag = 'input window, operand 1']
    #allocation6 [shape = 's32[2]{0}', space=sflag, size = 0x8, scoped, tag = 'scoped memory for tpu_custom_call.1']
    #allocation7 [shape = 'u8[8192]{0}', space=vmem, size = 0x2000, scoped, tag = 'output window, operand 0']
    %7 = vsyncpa [#allocation3], 0
    %s8 = scalar_lea.sflag [#allocation3], 1
    %9 = vsyncpa %s8, 0
    %10 = vsyncpa [#allocation6], 0
    %s11 = scalar_lea.sflag [#allocation6], 1
    %12 = vsyncpa %s11, 0
    %13 = vsyncpa [#allocation4], 0
    %s14 = scalar_lea.sflag [#allocation4], 1
    %15 = vsyncpa %s14, 0
    loop: start=0, step=1, limit=4
    $region2: #{tpu_custom_call.1} parent=1 // loop_pre_header
      _
    $region3: #{tpu_custom_call.1} parent=1 // loop_header
      %s17 = sphi 0, %s21
      %p18 = scmp.ge.s32.totalorder %s17, 4
      %s27 = sphi 0, %s29
      %s30 = sphi 0, %s27
      %s31 = sphi 0, %s30
      %s47 = sphi 0, %s31
      %s53 = sphi 0, %s55
      %s56 = sphi 0, %s53
      %s57 = sphi 0, %s56
      %s73 = sphi 0, %s57
      %s79 = sphi 0, %s81
      %s82 = sphi 0, %s79
      %s83 = sphi 0, %s82
      %s99 = sphi 0, %s83
    $region4: #{tpu_custom_call.1} parent=1 // loop_header_branch
      %20 = sbr.rel (%p18) target = $region8
    $region5: #{tpu_custom_call.1} parent=1 // loop_body
      %s22 = ssub.s32 %s17, 1
      %s23 = ssub.s32 %s17, 2
      %s24 = sadd.s32 %s17, 1
      %s25 = ssub.s32 %s17, %s24
      %p26 = scmp.eq.s32.totalorder %s25, 0
      %s28 = sadd.s32 %s27, 1
      %s29 = scalar_select %p26, %s27, %s28
      %p32 = pneg %p26
      %p33 = scmp.eq.s32.totalorder %s17, 1
      %p34 = por %p32, %p33
      %p35 = scmp.ne.s32.totalorder %s27, %s30
      %p36 = scmp.eq.s32.totalorder %s17, 0
      %p37 = por %p35, %p36
      %p38 = scmp.ne.s32.totalorder %s27, %s30
      %p39 = scmp.eq.s32.totalorder %s22, 1
      %p40 = por %p38, %p39
      %p41 = scmp.ne.s32.totalorder %s30, %s31
      %p42 = scmp.eq.s32.totalorder %s22, 0
      %p43 = por %p41, %p42
      %p44 = scmp.ne.s32.totalorder %s30, %s31
      %p45 = scmp.eq.s32.totalorder %s23, 1
      %p46 = por %p44, %p45
      %p48 = scmp.ne.s32.totalorder %s31, %s47
      %p49 = scmp.eq.s32.totalorder %s23, 0
      %p50 = por %p48, %p49
      %s51 = ssub.s32 %s17, %s24
      %p52 = scmp.eq.s32.totalorder %s51, 0
      %s54 = sadd.s32 %s53, 1
      %s55 = scalar_select %p52, %s53, %s54
      %p58 = pneg %p52
      %p59 = scmp.eq.s32.totalorder %s17, 1
      %p60 = por %p58, %p59
      %p61 = scmp.ne.s32.totalorder %s53, %s56
      %p62 = scmp.eq.s32.totalorder %s17, 0
      %p63 = por %p61, %p62
      %p64 = scmp.ne.s32.totalorder %s53, %s56
      %p65 = scmp.eq.s32.totalorder %s22, 1
      %p66 = por %p64, %p65
      %p67 = scmp.ne.s32.totalorder %s56, %s57
      %p68 = scmp.eq.s32.totalorder %s22, 0
      %p69 = por %p67, %p68
      %p70 = scmp.ne.s32.totalorder %s56, %s57
      %p71 = scmp.eq.s32.totalorder %s23, 1
      %p72 = por %p70, %p71
      %p74 = scmp.ne.s32.totalorder %s57, %s73
      %p75 = scmp.eq.s32.totalorder %s23, 0
      %p76 = por %p74, %p75
      %s77 = ssub.s32 %s17, %s24
      %p78 = scmp.eq.s32.totalorder %s77, 0
      %s80 = sadd.s32 %s79, 1
      %s81 = scalar_select %p78, %s79, %s80
      %p84 = pneg %p78
      %p85 = scmp.eq.s32.totalorder %s17, 1
      %p86 = por %p84, %p85
      %p87 = scmp.ne.s32.totalorder %s79, %s82
      %p88 = scmp.eq.s32.totalorder %s17, 0
      %p89 = por %p87, %p88
      %p90 = scmp.ne.s32.totalorder %s79, %s82
      %p91 = scmp.eq.s32.totalorder %s22, 1
      %p92 = por %p90, %p91
      %p93 = scmp.ne.s32.totalorder %s82, %s83
      %p94 = scmp.eq.s32.totalorder %s22, 0
      %p95 = por %p93, %p94
      %p96 = scmp.ne.s32.totalorder %s82, %s83
      %p97 = scmp.eq.s32.totalorder %s23, 1
      %p98 = por %p96, %p97
      %p100 = scmp.ne.s32.totalorder %s83, %s99
      %p101 = scmp.eq.s32.totalorder %s23, 0
      %p102 = por %p100, %p101
      %p103 = scmp.le.s32.totalorder 1, %s17
      %p104 = scmp.lt.s32.totalorder %s17, 3
      %p105 = pnand %p103, %p104
      %p106 = pneg %p105
      // Predicated region
      $region9: #{tpu_custom_call.1} parent=5 // pred_check
        _
      $region10: #{tpu_custom_call.1} parent=5 // pred_check_branch
        %108 = sbr.rel (%p105) target = $region12
      $region11: #{tpu_custom_call.1} parent=5 // pred_region
        %s109 = ssub.s32 %s17, 1
      $region12: #{tpu_custom_call.1} parent=5 // pred_fallthru
        _
      %p110 = scmp.lt.s32.totalorder %s17, 2
      // Predicated region
      $region13: #{tpu_custom_call.1} parent=5 // pred_check
        %p111 = pneg %p110
      $region14: #{tpu_custom_call.1} parent=5 // pred_check_branch
        %113 = sbr.rel (%p111) target = $region16
      $region15: #{tpu_custom_call.1} parent=5 // pred_region
        // Predicated region
        $region17: #{tpu_custom_call.1} parent=15 // pred_check
          %p114 = pneg %p37
        $region18: #{tpu_custom_call.1} parent=15 // pred_check_branch
          %116 = sbr.rel (%p114) target = $region20
        $region19: #{tpu_custom_call.1} parent=15 // pred_region
          %s117 = sand.u32 %s27, 1
          %s118 = scalar_lea.sflag [#allocation3], %s117
          %s119 = sand.u32 %s27, 1
          %s120 = smul.addr %s119, 256
          %s121 = scalar_lea.vmem [#allocation2], %s120
          %s122 = smul.u32 32, %s17
          %s124 = ssub.s32 4096, 4096
          %125 = vsyncadd %s118, %s124
          %s126 = smul.addr %s122, 128
          %s127 = scalar_lea.hbm %s0, %s126
          %s128 = sshll.u32 %s121, 4
          %s129 = int_to_ptr.vmem [resolvable:$true] %s128
          %134 = dma.hbm_to_vmem [thread:$0]  %s127, 4096, %s129, %s118, 128, 128, 8
        $region20: #{tpu_custom_call.1} parent=15 // pred_fallthru
          _
        // Predicated region
        $region21: #{tpu_custom_call.1} parent=15 // pred_check
          %p135 = pneg %p63
        $region22: #{tpu_custom_call.1} parent=15 // pred_check_branch
          %137 = sbr.rel (%p135) target = $region24
        $region23: #{tpu_custom_call.1} parent=15 // pred_region
          %s138 = sand.u32 %s53, 1
          %s139 = scalar_lea.sflag [#allocation6], %s138
          %s140 = sand.u32 %s53, 1
          %s141 = smul.addr %s140, 256
          %s142 = scalar_lea.vmem [#allocation5], %s141
          %s143 = smul.u32 32, %s17
          %s145 = ssub.s32 4096, 4096
          %146 = vsyncadd %s139, %s145
          %s147 = smul.addr %s143, 128
          %s148 = scalar_lea.hbm %s1, %s147
          %s149 = sshll.u32 %s142, 4
          %s150 = int_to_ptr.vmem [resolvable:$true] %s149
          %155 = dma.hbm_to_vmem [thread:$0]  %s148, 4096, %s150, %s139, 128, 128, 8
        $region24: #{tpu_custom_call.1} parent=15 // pred_fallthru
          _
      $region16: #{tpu_custom_call.1} parent=5 // pred_fallthru
        _
      %p156 = scmp.le.s32.totalorder 1, %s17
      %p157 = scmp.lt.s32.totalorder %s17, 3
      %p158 = pnand %p156, %p157
      %p159 = pneg %p158
      // Predicated region
      $region25: #{tpu_custom_call.1} parent=5 // pred_check
        _
      $region26: #{tpu_custom_call.1} parent=5 // pred_check_branch
        %161 = sbr.rel (%p158) target = $region28
      $region27: #{tpu_custom_call.1} parent=5 // pred_region
        %s162 = ssub.s32 %s17, 1
        %s163 = sand.u32 %s30, 1
        %s164 = scalar_lea.sflag [#allocation3], %s163
        %s165 = sand.u32 %s30, 1
        %s166 = smul.addr %s165, 256
        %s167 = scalar_lea.vmem [#allocation2], %s166
        // Predicated region
        $region29: #{tpu_custom_call.1} parent=27 // pred_check
          %p168 = pneg %p43
        $region30: #{tpu_custom_call.1} parent=27 // pred_check_branch
          %170 = sbr.rel (%p168) target = $region32
        $region31: #{tpu_custom_call.1} parent=27 // pred_region
          %171 = dma.done %s164, 4096
        $region32: #{tpu_custom_call.1} parent=27 // pred_fallthru
          _
        %s172 = sand.u32 %s56, 1
        %s173 = scalar_lea.sflag [#allocation6], %s172
        %s174 = sand.u32 %s56, 1
        %s175 = smul.addr %s174, 256
        %s176 = scalar_lea.vmem [#allocation5], %s175
        // Predicated region
        $region33: #{tpu_custom_call.1} parent=27 // pred_check
          %p177 = pneg %p69
        $region34: #{tpu_custom_call.1} parent=27 // pred_check_branch
          %179 = sbr.rel (%p177) target = $region36
        $region35: #{tpu_custom_call.1} parent=27 // pred_region
          %180 = dma.done %s173, 4096
        $region36: #{tpu_custom_call.1} parent=27 // pred_fallthru
          _
        %s181 = sand.u32 %s30, 1
        %s182 = scalar_lea.sflag [#allocation3], %s181
        %s183 = sand.u32 %s30, 1
        %s184 = smul.addr %s183, 256
        %s185 = scalar_lea.vmem [#allocation2], %s184
        %p186 = pneg %p43
        %p187 = pneg %p40
        %s188 = sand.u32 %s56, 1
        %s189 = scalar_lea.sflag [#allocation6], %s188
        %s190 = sand.u32 %s56, 1
        %s191 = smul.addr %s190, 256
        %s192 = scalar_lea.vmem [#allocation5], %s191
        %p193 = pneg %p69
        %p194 = pneg %p66
        %p195 = pneg %p95
        %p196 = pneg %p92
        %s197 = sand.u32 %s82, 1
        %s198 = scalar_lea.sflag [#allocation4], %s197
        %s199 = sand.u32 %s82, 1
        %s200 = smul.addr %s199, 8
        %s201 = scalar_lea.vmem [#allocation7], %s200
        %s202 = smul.u32 32, %s22
        %s203 = smul.u32 32, %s22
        %v204 = vld [vmem:[%s167] sm:$0xff]
        %v205 = vld [vmem:[%s167 + $0x8] sm:$0xff]
        %v206 = vld [vmem:[%s167 + $0x10] sm:$0xff]
        %v207 = vld [vmem:[%s167 + $0x18] sm:$0xff]
        %v208 = vld [vmem:[%s167 + $0x20] sm:$0xff]
        %v209 = vld [vmem:[%s167 + $0x28] sm:$0xff]
        %v210 = vld [vmem:[%s167 + $0x30] sm:$0xff]
        %v211 = vld [vmem:[%s167 + $0x38] sm:$0xff]
        %v212 = vld [vmem:[%s167 + $0x40] sm:$0xff]
        %v213 = vld [vmem:[%s167 + $0x48] sm:$0xff]
        %v214 = vld [vmem:[%s167 + $0x50] sm:$0xff]
        %v215 = vld [vmem:[%s167 + $0x58] sm:$0xff]
        %v216 = vld [vmem:[%s167 + $0x60] sm:$0xff]
        %v217 = vld [vmem:[%s167 + $0x68] sm:$0xff]
        %v218 = vld [vmem:[%s167 + $0x70] sm:$0xff]
        %v219 = vld [vmem:[%s167 + $0x78] sm:$0xff]
        %v220 = vld [vmem:[%s167 + $0x80] sm:$0xff]
        %v221 = vld [vmem:[%s167 + $0x88] sm:$0xff]
        %v222 = vld [vmem:[%s167 + $0x90] sm:$0xff]
        %v223 = vld [vmem:[%s167 + $0x98] sm:$0xff]
        %v224 = vld [vmem:[%s167 + $0xa0] sm:$0xff]
        %v225 = vld [vmem:[%s167 + $0xa8] sm:$0xff]
        %v226 = vld [vmem:[%s167 + $0xb0] sm:$0xff]
        %v227 = vld [vmem:[%s167 + $0xb8] sm:$0xff]
        %v228 = vld [vmem:[%s167 + $0xc0] sm:$0xff]
        %v229 = vld [vmem:[%s167 + $0xc8] sm:$0xff]
        %v230 = vld [vmem:[%s167 + $0xd0] sm:$0xff]
        %v231 = vld [vmem:[%s167 + $0xd8] sm:$0xff]
        %v232 = vld [vmem:[%s167 + $0xe0] sm:$0xff]
        %v233 = vld [vmem:[%s167 + $0xe8] sm:$0xff]
        %v234 = vld [vmem:[%s167 + $0xf0] sm:$0xff]
        %v235 = vld [vmem:[%s167 + $0xf8] sm:$0xff]
        %v236 = vld [vmem:[%s176] sm:$0xff]
        %v237 = vld [vmem:[%s176 + $0x8] sm:$0xff]
        %v238 = vld [vmem:[%s176 + $0x10] sm:$0xff]
        %v239 = vld [vmem:[%s176 + $0x18] sm:$0xff]
        %v240 = vld [vmem:[%s176 + $0x20] sm:$0xff]
        %v241 = vld [vmem:[%s176 + $0x28] sm:$0xff]
        %v242 = vld [vmem:[%s176 + $0x30] sm:$0xff]
        %v243 = vld [vmem:[%s176 + $0x38] sm:$0xff]
        %v244 = vld [vmem:[%s176 + $0x40] sm:$0xff]
        %v245 = vld [vmem:[%s176 + $0x48] sm:$0xff]
        %v246 = vld [vmem:[%s176 + $0x50] sm:$0xff]
        %v247 = vld [vmem:[%s176 + $0x58] sm:$0xff]
        %v248 = vld [vmem:[%s176 + $0x60] sm:$0xff]
        %v249 = vld [vmem:[%s176 + $0x68] sm:$0xff]
        %v250 = vld [vmem:[%s176 + $0x70] sm:$0xff]
        %v251 = vld [vmem:[%s176 + $0x78] sm:$0xff]
        %v252 = vld [vmem:[%s176 + $0x80] sm:$0xff]
        %v253 = vld [vmem:[%s176 + $0x88] sm:$0xff]
        %v254 = vld [vmem:[%s176 + $0x90] sm:$0xff]
        %v255 = vld [vmem:[%s176 + $0x98] sm:$0xff]
        %v256 = vld [vmem:[%s176 + $0xa0] sm:$0xff]
        %v257 = vld [vmem:[%s176 + $0xa8] sm:$0xff]
        %v258 = vld [vmem:[%s176 + $0xb0] sm:$0xff]
        %v259 = vld [vmem:[%s176 + $0xb8] sm:$0xff]
        %v260 = vld [vmem:[%s176 + $0xc0] sm:$0xff]
        %v261 = vld [vmem:[%s176 + $0xc8] sm:$0xff]
        %v262 = vld [vmem:[%s176 + $0xd0] sm:$0xff]
        %v263 = vld [vmem:[%s176 + $0xd8] sm:$0xff]
        %v264 = vld [vmem:[%s176 + $0xe0] sm:$0xff]
        %v265 = vld [vmem:[%s176 + $0xe8] sm:$0xff]
        %v266 = vld [vmem:[%s176 + $0xf0] sm:$0xff]
        %v267 = vld [vmem:[%s176 + $0xf8] sm:$0xff]
        %v268 = vsub.f32 %v204, %v236
        %v269 = vsub.f32 %v205, %v237
        %v270 = vsub.f32 %v206, %v238
        %v271 = vsub.f32 %v207, %v239
        %v272 = vsub.f32 %v208, %v240
        %v273 = vsub.f32 %v209, %v241
        %v274 = vsub.f32 %v210, %v242
        %v275 = vsub.f32 %v211, %v243
        %v276 = vsub.f32 %v212, %v244
        %v277 = vsub.f32 %v213, %v245
        %v278 = vsub.f32 %v214, %v246
        %v279 = vsub.f32 %v215, %v247
        %v280 = vsub.f32 %v216, %v248
        %v281 = vsub.f32 %v217, %v249
        %v282 = vsub.f32 %v218, %v250
        %v283 = vsub.f32 %v219, %v251
        %v284 = vsub.f32 %v220, %v252
        %v285 = vsub.f32 %v221, %v253
        %v286 = vsub.f32 %v222, %v254
        %v287 = vsub.f32 %v223, %v255
        %v288 = vsub.f32 %v224, %v256
        %v289 = vsub.f32 %v225, %v257
        %v290 = vsub.f32 %v226, %v258
        %v291 = vsub.f32 %v227, %v259
        %v292 = vsub.f32 %v228, %v260
        %v293 = vsub.f32 %v229, %v261
        %v294 = vsub.f32 %v230, %v262
        %v295 = vsub.f32 %v231, %v263
        %v296 = vsub.f32 %v232, %v264
        %v297 = vsub.f32 %v233, %v265
        %v298 = vsub.f32 %v234, %v266
        %v299 = vsub.f32 %v235, %v267
        %v300 = vand.u32 2147483647, %v268
        %v301 = vand.u32 2147483647, %v269
        %v302 = vand.u32 2147483647, %v270
        %v303 = vand.u32 2147483647, %v271
        %v304 = vand.u32 2147483647, %v272
        %v305 = vand.u32 2147483647, %v273
        %v306 = vand.u32 2147483647, %v274
        %v307 = vand.u32 2147483647, %v275
        %v308 = vand.u32 2147483647, %v276
        %v309 = vand.u32 2147483647, %v277
        %v310 = vand.u32 2147483647, %v278
        %v311 = vand.u32 2147483647, %v279
        %v312 = vand.u32 2147483647, %v280
        %v313 = vand.u32 2147483647, %v281
        %v314 = vand.u32 2147483647, %v282
        %v315 = vand.u32 2147483647, %v283
        %v316 = vand.u32 2147483647, %v284
        %v317 = vand.u32 2147483647, %v285
        %v318 = vand.u32 2147483647, %v286
        %v319 = vand.u32 2147483647, %v287
        %v320 = vand.u32 2147483647, %v288
        %v321 = vand.u32 2147483647, %v289
        %v322 = vand.u32 2147483647, %v290
        %v323 = vand.u32 2147483647, %v291
        %v324 = vand.u32 2147483647, %v292
        %v325 = vand.u32 2147483647, %v293
        %v326 = vand.u32 2147483647, %v294
        %v327 = vand.u32 2147483647, %v295
        %v328 = vand.u32 2147483647, %v296
        %v329 = vand.u32 2147483647, %v297
        %v330 = vand.u32 2147483647, %v298
        %v331 = vand.u32 2147483647, %v299
        %v332 = vadd.f32 %v300, %v301
        %v333 = vadd.f32 %v332, %v302
        %v334 = vadd.f32 %v333, %v303
        %v335 = vadd.f32 %v334, %v304
        %v336 = vadd.f32 %v335, %v305
        %v337 = vadd.f32 %v336, %v306
        %v338 = vadd.f32 %v337, %v307
        %v339 = vadd.f32 %v338, %v308
        %v340 = vadd.f32 %v339, %v309
        %v341 = vadd.f32 %v340, %v310
        %v342 = vadd.f32 %v341, %v311
        %v343 = vadd.f32 %v342, %v312
        %v344 = vadd.f32 %v343, %v313
        %v345 = vadd.f32 %v344, %v314
        %v346 = vadd.f32 %v345, %v315
        %v347 = vadd.f32 %v346, %v316
        %v348 = vadd.f32 %v347, %v317
        %v349 = vadd.f32 %v348, %v318
        %v350 = vadd.f32 %v349, %v319
        %v351 = vadd.f32 %v350, %v320
        %v352 = vadd.f32 %v351, %v321
        %v353 = vadd.f32 %v352, %v322
        %v354 = vadd.f32 %v353, %v323
        %v355 = vadd.f32 %v354, %v324
        %v356 = vadd.f32 %v355, %v325
        %v357 = vadd.f32 %v356, %v326
        %v358 = vadd.f32 %v357, %v327
        %v359 = vadd.f32 %v358, %v328
        %v360 = vadd.f32 %v359, %v329
        %v361 = vadd.f32 %v360, %v330
        %v362 = vadd.f32 %v361, %v331
        %363 = vst [vmem:[%s201] sm:$0xff] %v362
        %s364 = sand.u32 %s82, 1
        %s365 = scalar_lea.sflag [#allocation4], %s364
        %s366 = sand.u32 %s82, 1
        %s367 = smul.addr %s366, 8
        %s368 = scalar_lea.vmem [#allocation7], %s367
        // Predicated region
        $region37: #{tpu_custom_call.1} parent=27 // pred_check
          %p369 = pneg %p92
        $region38: #{tpu_custom_call.1} parent=27 // pred_check_branch
          %371 = sbr.rel (%p369) target = $region40
        $region39: #{tpu_custom_call.1} parent=27 // pred_region
          %s373 = ssub.s32 128, 128
          %374 = vsyncadd %s365, %s373
          %s375 = smul.addr %s22, 128
          %s376 = scalar_lea.hbm %s2, %s375
          %s378 = sshll.u32 %s368, 4
          %s379 = int_to_ptr.vmem [resolvable:$true] %s378
          %381 = dma.vmem_to_hbm [thread:$0]  %s379, 128, %s376, %s365
        $region40: #{tpu_custom_call.1} parent=27 // pred_fallthru
          _
      $region28: #{tpu_custom_call.1} parent=5 // pred_fallthru
        _
      %p382 = scmp.le.s32.totalorder 2, %s17
      // Predicated region
      $region41: #{tpu_custom_call.1} parent=5 // pred_check
        %p383 = pneg %p382
      $region42: #{tpu_custom_call.1} parent=5 // pred_check_branch
        %385 = sbr.rel (%p383) target = $region44
      $region43: #{tpu_custom_call.1} parent=5 // pred_region
        %s386 = ssub.s32 %s17, 2
        // Predicated region
        $region45: #{tpu_custom_call.1} parent=43 // pred_check
          %p387 = pneg %p98
        $region46: #{tpu_custom_call.1} parent=43 // pred_check_branch
          %389 = sbr.rel (%p387) target = $region48
        $region47: #{tpu_custom_call.1} parent=43 // pred_region
          %s390 = sand.u32 %s83, 1
          %s391 = scalar_lea.sflag [#allocation4], %s390
          %s392 = sand.u32 %s83, 1
          %s393 = smul.addr %s392, 8
          %s394 = scalar_lea.vmem [#allocation7], %s393
          %395 = dma.done %s391, 128
        $region48: #{tpu_custom_call.1} parent=43 // pred_fallthru
          _
      $region44: #{tpu_custom_call.1} parent=5 // pred_fallthru
        _
    $region6: #{tpu_custom_call.1} parent=1 // loop_footer
      %s21 = sadd.s32 1, %s17
    $region7: #{tpu_custom_call.1} parent=1 // loop_footer_branch
      %16 = sbr.rel target = $region3
    $region8: #{tpu_custom_call.1} parent=1 // loop_exit
      _
    %396 = vsyncpa [#allocation3], 1
    %s397 = scalar_lea.sflag [#allocation3], 1
    %398 = vsyncpa %s397, 1
    %399 = vsyncpa [#allocation6], 1
    %s400 = scalar_lea.sflag [#allocation6], 1
    %401 = vsyncpa %s400, 1
    %402 = vsyncpa [#allocation4], 1
    %s403 = scalar_lea.sflag [#allocation4], 1
    %404 = vsyncpa %s403, 1

</llo_original>
